<compile_context>
chip_gen: v6e
topology: v6e:2x2x1
jax: 0.10.0
libtpu: 0.0.40
codegen_flags: <defaults>
</compile_context>

<pallas_src>
import jax
import jax.numpy as jnp
from jax.experimental import pallas as pl
from jax.experimental.pallas import tpu as pltpu


def quadratic_kernel(x_ref, w_ref, o_ref):
    """Per-batch-tile quadratic form: scores = sum(x * (x @ W_sym), axis=1).

    x_ref: (TB, D)  batch tile of the input
    w_ref: (D, D)   already-symmetrized weight matrix (VMEM-resident every step)
    o_ref: (1, TB)  lane-dense output tile (batch laid along the lane axis)
    """
    x = x_ref[...]                                                    # (TB, D)
    y = jnp.dot(x, w_ref[...], preferred_element_type=jnp.float32)    # MXU, (TB, D)
    # Row reduce, then place the TB scores on the lane axis -> dense store.
    o_ref[...] = jnp.sum(x * y, axis=1).reshape(1, -1)                # (1, TB)


def quadratic_model(x, W, *, tb=None):
    """JAX wrapper reproducing QuadraticModel.forward semantics.

    x: (B, D) float32, W: (D, D) float32  ->  scores: (B,) float32
    Note: the PyTorch forward does NOT add the bias `b`, so neither do we.
    """
    B, D = x.shape

    # Hoisted, one-time symmetrization (exact parity with the PyTorch forward).
    W_sym = 0.5 * (W + W.T)

    # Batch tile: one grid step for small batches; up to 1024 rows otherwise.
    if tb is None:
        tb = B if B <= 1024 else 1024
    assert B % tb == 0, "batch must be divisible by the batch tile"
    num_tiles = B // tb

    # Explicit scoped-VMEM budget: double-buffered x tile + resident W + output,
    # with slack; capped well below 64 MiB so it is safe on v7x as well.
    vmem_bytes = 2 * (tb * D + D * D + tb) * 4 + (1 << 20)
    vmem_limit = int(min(max(vmem_bytes, 4 << 20), 48 << 20))

    # TODO(synk): for large D the resident (D, D) W block should be K-tiled
    # (grid axis marked "arbitrary" + f32 VMEM accumulator) to stay within
    # v7x's 64 MiB VMEM; not needed at these shapes.
    out = pl.pallas_call(
        quadratic_kernel,
        out_shape=jax.ShapeDtypeStruct((1, B), jnp.float32),
        grid_spec=pltpu.PrefetchScalarGridSpec(
            num_scalar_prefetch=0,
            grid=(num_tiles,),
            in_specs=[
                pl.BlockSpec((tb, D), lambda i: (i, 0)),   # x batch tile
                pl.BlockSpec((D, D), lambda i: (0, 0)),    # full W_sym, resident
            ],
            out_specs=pl.BlockSpec((1, tb), lambda i: (0, i)),  # lane-dense scores
        ),
        compiler_params=pltpu.CompilerParams(
            dimension_semantics=("parallel",),
            vmem_limit_bytes=vmem_limit,
        ),
    )(x, W_sym)
    return out.reshape(B)   # (B,)


def reference(x, W):
    W_sym = 0.5 * (W + W.T)
    return jnp.sum(x * (x @ W_sym), axis=1)


if __name__ == "__main__":
    key = jax.random.PRNGKey(0)
    k_x, k_w = jax.random.split(key)

    B, D = 16, 32          # small shapes: batch=16, input_dim=32
    x = jax.random.normal(k_x, (B, D), dtype=jnp.float32)
    # Deterministic synthetic init (mirrors the rand_init=True path: randn * 0.01).
    # TODO(synk): initialize_weight_matrix() is not provided in the source; using
    # the rand_init-style deterministic init instead.
    W = 0.01 * jax.random.normal(k_w, (D, D), dtype=jnp.float32)
    b = jnp.zeros((1,), dtype=jnp.float32)  # defined per __init__, unused in forward

    scores = quadratic_model(x, W)
    scores = jax.block_until_ready(scores)

    ref = reference(x, W)
    assert scores.shape == (B,)
    assert jnp.allclose(scores, ref, atol=1e-5, rtol=1e-5), (scores, ref)
    print("KERNEL_OK")
</pallas_src>

<mosaic_0001>
module attributes {stable_mosaic.version = 11 : i64} {
  func.func @quadratic_kernel(%arg0: i32, %arg1: memref<16x32xf32, #tpu.memory_space<vmem>>, %arg2: memref<32x32xf32, #tpu.memory_space<vmem>>, %arg3: memref<1x16xf32, #tpu.memory_space<vmem>>) attributes {dimension_semantics = [#tpu.dimension_semantics<parallel>], iteration_bounds = array<i64: 1>, scalar_prefetch = 0 : i64, scratch_operands = 0 : i64, tpu.core_type = #tpu.core_type<tc>, window_params = [{transform_indices = @transform_0, window_bounds = array<i64: 16, 32>}, {pipeline_mode = #tpu.pipeline_mode<synchronous>, transform_indices = @transform_1, window_bounds = array<i64: 32, 32>}, {transform_indices = @transform_2, window_bounds = array<i64: 1, 16>}]} {
    %c0 = arith.constant 0 : index
    %c0_0 = arith.constant 0 : index
    %0 = vector.load %arg1[%c0, %c0_0] : memref<16x32xf32, #tpu.memory_space<vmem>>, vector<16x32xf32>
    %c0_1 = arith.constant 0 : index
    %c0_2 = arith.constant 0 : index
    %1 = vector.load %arg2[%c0_1, %c0_2] : memref<32x32xf32, #tpu.memory_space<vmem>>, vector<32x32xf32>
    %cst = arith.constant dense<0.000000e+00> : vector<16x32xf32>
    %2 = tpu.matmul %0, %1, %cst {dimension_numbers = #tpu.dot_dimension_numbers<[1], [0], [0], [1], [0, 0, 1, 1], [], []>} : vector<16x32xf32>, vector<32x32xf32>, vector<16x32xf32> -> vector<16x32xf32>
    %3 = arith.mulf %0, %2 : vector<16x32xf32>
    %cst_3 = arith.constant dense<0.000000e+00> : vector<16xf32>
    %4 = vector.multi_reduction <add>, %3, %cst_3 [1] : vector<16x32xf32> to vector<16xf32>
    %5 = vector.shape_cast %4 : vector<16xf32> to vector<1x16xf32>
    %c0_4 = arith.constant 0 : index
    %c0_5 = arith.constant 0 : index
    %6 = vector.load %arg3[%c0_4, %c0_5] : memref<1x16xf32, #tpu.memory_space<vmem>>, vector<1x16xf32>
    tpu.vector_store %arg3[%c0_4, %c0_5], %5 {strides = array<i32>} : memref<1x16xf32, #tpu.memory_space<vmem>>, vector<1x16xf32>,
    return
  }
  func.func @transform_0(%arg0: i32) -> (i32, i32) {
    %c0_i32 = arith.constant 0 : i32
    %c0_i32_0 = arith.constant 0 : i32
    return %arg0, %c0_i32 : i32, i32
  }
  func.func @transform_1(%arg0: i32) -> (i32, i32) {
    %c0_i32 = arith.constant 0 : i32
    %c0_i32_0 = arith.constant 0 : i32
    %c0_i32_1 = arith.constant 0 : i32
    return %c0_i32, %c0_i32_0 : i32, i32
  }
  func.func @transform_2(%arg0: i32) -> (i32, i32) {
    %c0_i32 = arith.constant 0 : i32
    %c0_i32_0 = arith.constant 0 : i32
    return %c0_i32, %arg0 : i32, i32
  }
}

</mosaic_0001>

<llo_original>
// kernel: tpu_custom_call.1
$region0: #{tpu_custom_call.1}
  #allocation0 [shape = 'u32[]', space=smem, size = 0x4, offset = 0x4, fixed_abs, tag = 'smem constant byte address 0x4 - core index']
  #allocation1 [shape = 'u32[144,128]{1,0:T(1,128)}', space=vmem, size = 0x12000, scoped, tag = 'internal scratch']
  %s0 = inlined_call_operand.hbm [shape: f32[16,32], index: 0, kind: input, shape index: {}]
  %s1 = inlined_call_operand.hbm [shape: f32[32,32], index: 1, kind: input, shape index: {}]
  %s2 = inlined_call_operand.hbm [shape: f32[1,16], index: 2, kind: output, shape index: {}]
  %s3 = sld [smem:[#allocation0]]
  $region26: #{tpu_custom_call.1} parent=0
    _
  %s5 = ssub.s32 1, %s3
  %s6 = scalar_select 0, %s5, %s3
  $region1: #{tpu_custom_call.1} parent=0
    #allocation2 [shape = 'u8[8192]{0}', space=vmem, size = 0x2000, scoped, tag = 'input window, operand 0, single buffered']
    #allocation3 [shape = 's32[1]{0}', space=sflag, size = 0x4, scoped, tag = 'scoped memory for tpu_custom_call.1']
    #allocation4 [shape = 's32[1]{0}', space=sflag, size = 0x4, scoped, tag = 'scoped memory for tpu_custom_call.1']
    #allocation5 [shape = 'u8[16384]{0}', space=vmem, size = 0x4000, scoped, tag = 'input window, operand 1, single buffered']
    #allocation6 [shape = 's32[1]{0}', space=sflag, size = 0x4, scoped, tag = 'scoped memory for tpu_custom_call.1']
    #allocation7 [shape = 'u8[512]{0}', space=vmem, size = 0x400, scoped, tag = 'output window, operand 0, single buffered']
    %7 = vsyncpa [#allocation3], 0
    %8 = vsyncpa [#allocation6], 0
    %9 = vsyncpa [#allocation4], 0
    // Predicated region
    $region2: #{tpu_custom_call.1} parent=1 // pred_check
      _
    $region3: #{tpu_custom_call.1} parent=1 // pred_check_branch
      %11 = sbr.rel (0) target = $region5
    $region4: #{tpu_custom_call.1} parent=1 // pred_region
      %s13 = ssub.s32 256, 256
      %14 = vsyncadd [#allocation3], %s13
      %s15 = sshll.u32 [#allocation2], 4
      %s16 = int_to_ptr.vmem [resolvable:$true] %s15
      %21 = dma.hbm_to_vmem [thread:$0]  %s0, 256, %s16, [#allocation3], 128, 128, 8
    $region5: #{tpu_custom_call.1} parent=1 // pred_fallthru
      _
    // Predicated region
    $region6: #{tpu_custom_call.1} parent=1 // pred_check
      _
    $region7: #{tpu_custom_call.1} parent=1 // pred_check_branch
      %23 = sbr.rel (0) target = $region9
    $region8: #{tpu_custom_call.1} parent=1 // pred_region
      %s25 = ssub.s32 512, 512
      %26 = vsyncadd [#allocation6], %s25
      %s27 = sshll.u32 [#allocation5], 4
      %s28 = int_to_ptr.vmem [resolvable:$true] %s27
      %33 = dma.hbm_to_vmem [thread:$0]  %s1, 512, %s28, [#allocation6], 128, 128, 8
    $region9: #{tpu_custom_call.1} parent=1 // pred_fallthru
      _
    // Predicated region
    $region10: #{tpu_custom_call.1} parent=1 // pred_check
      _
    $region11: #{tpu_custom_call.1} parent=1 // pred_check_branch
      %35 = sbr.rel (0) target = $region13
    $region12: #{tpu_custom_call.1} parent=1 // pred_region
      %36 = dma.done [#allocation3], 256
    $region13: #{tpu_custom_call.1} parent=1 // pred_fallthru
      _
    // Predicated region
    $region14: #{tpu_custom_call.1} parent=1 // pred_check
      _
    $region15: #{tpu_custom_call.1} parent=1 // pred_check_branch
      %38 = sbr.rel (0) target = $region17
    $region16: #{tpu_custom_call.1} parent=1 // pred_region
      %39 = dma.done [#allocation6], 512
    $region17: #{tpu_custom_call.1} parent=1 // pred_fallthru
      _
    %v40 = vld [vmem:[#allocation2] sm:$0xff]
    %v41 = vld [vmem:[#allocation2 + $0x8] sm:$0xff]
    %v42 = vld [vmem:[#allocation5] sm:$0xff]
    %v43 = vld [vmem:[#allocation5 + $0x8] sm:$0xff]
    %v44 = vld [vmem:[#allocation5 + $0x10] sm:$0xff]
    %v45 = vld [vmem:[#allocation5 + $0x18] sm:$0xff]
    %vm46 = vcmask 261120
    %v48 = vsel %vm46, %v40, 0
    %v51 = vsel %vm46, %v41, 0
    %53 = vmatprep.subr.mxu0 0.0
    %54 = vmatpush1.msra.mxu0 0.0
    %55 = vmatprep.subr.mxu0 0.0
    %56 = vmatpush1.msra.mxu0 0.0
    %57 = vmatprep.subr.mxu0 0.0
    %58 = vmatpush1.msra.mxu0 0.0
    %59 = vmatprep.subr.mxu0 0.0
    %60 = vmatpush1.msra.mxu0 0.0
    %61 = vmatprep.subr.mxu0 0.0
    %62 = vmatpush1.msra.mxu0 0.0
    %63 = vmatprep.subr.mxu0 0.0
    %64 = vmatpush1.msra.mxu0 0.0
    %65 = vmatprep.subr.mxu0 0.0
    %66 = vmatpush1.msra.mxu0 0.0
    %67 = vmatprep.subr.mxu0 0.0
    %68 = vmatpush1.msra.mxu0 0.0
    %69 = vmatprep.subr.mxu0 0.0
    %70 = vmatpush1.msra.mxu0 0.0
    %71 = vmatprep.subr.mxu0 0.0
    %72 = vmatpush1.msra.mxu0 0.0
    %73 = vmatprep.subr.mxu0 0.0
    %74 = vmatpush1.msra.mxu0 0.0
    %75 = vmatprep.subr.mxu0 0.0
    %76 = vmatpush1.msra.mxu0 0.0
    %77 = vmatprep.subr.mxu0 0.0
    %78 = vmatpush1.msra.mxu0 %v45
    %79 = vmatprep.subr.mxu0 0.0
    %80 = vmatpush1.msra.mxu0 %v44
    %81 = vmatprep.subr.mxu0 0.0
    %82 = vmatpush1.msra.mxu0 %v43
    %83 = vmatprep.subr.mxu0 0.0
    %84 = vmatpush1.msra.mxu0 %v42
    %85 = vmatprep.subr.mxu0 0.0
    %86 = vmatpush2.msra.mxu0 0.0
    %87 = vmatprep.subr.mxu0 0.0
    %88 = vmatpush2.msra.mxu0 0.0
    %89 = vmatprep.subr.mxu0 0.0
    %90 = vmatpush2.msra.mxu0 0.0
    %91 = vmatprep.subr.mxu0 0.0
    %92 = vmatpush2.msra.mxu0 0.0
    %93 = vmatprep.subr.mxu0 0.0
    %94 = vmatpush2.msra.mxu0 0.0
    %95 = vmatprep.subr.mxu0 0.0
    %96 = vmatpush2.msra.mxu0 0.0
    %97 = vmatprep.subr.mxu0 0.0
    %98 = vmatpush2.msra.mxu0 0.0
    %99 = vmatprep.subr.mxu0 0.0
    %100 = vmatpush2.msra.mxu0 0.0
    %101 = vmatprep.subr.mxu0 0.0
    %102 = vmatpush2.msra.mxu0 0.0
    %103 = vmatprep.subr.mxu0 0.0
    %104 = vmatpush2.msra.mxu0 0.0
    %105 = vmatprep.subr.mxu0 0.0
    %106 = vmatpush2.msra.mxu0 0.0
    %107 = vmatprep.subr.mxu0 0.0
    %108 = vmatpush2.msra.mxu0 0.0
    %109 = vmatprep.subr.mxu0 0.0
    %110 = vmatpush2.msra.mxu0 0.0
    %111 = vmatprep.subr.mxu0 0.0
    %112 = vmatpush2.msra.mxu0 0.0
    %113 = vmatprep.subr.mxu0 0.0
    %114 = vmatpush2.msra.mxu0 0.0
    %115 = vmatprep.subr.mxu0 0.0
    %116 = vmatpush2.msra.mxu0 0.0
    %117 = vmatprep.mubr.f32.mxu0 0.0
    %118 = vmatmul.mubr.f32.gmra.mxu0 %v48
    %v119 = vpop.f32.mrf.mxu0
    %v120 = vadd.f32 0.0, %v119
    %v121 = vpop.f32.mrf.mxu0
    %122 = vmatprep.mubr.f32.mxu0 0.0
    %123 = vmatmul.mubr.f32.gmra.mxu0 %v51
    %v124 = vpop.f32.mrf.mxu0
    %v125 = vadd.f32 0.0, %v124
    %v126 = vpop.f32.mrf.mxu0
    %127 = vdwg.mxu0
    %v128 = vmul.f32 %v40, %v120
    %v129 = vmul.f32 %v41, %v125
    %v130 = vsel %vm46, %v128, 0.0
    %131 = vadd.xlane.f32.xlu0 %v130
    %v132 = vpop.xlane.xlu0 %131
    %v133 = vsel %vm46, %v129, 0.0
    %134 = vadd.xlane.f32.xlu0 %v133
    %v135 = vpop.xlane.xlu0 %134
    %v138 = vlaneseq
    %v139 = vand.u32 %v138, 127
    %v140 = vlaneseq
    %v141 = vshrl.u32 %v140, 7
    %v142 = vsub.s32 %v139, %v141
    %v143 = vrot.slane %v132, %v142
    %v144 = vadd.s32 %v139, 4294967288
    %v145 = vlaneseq
    %v146 = vshrl.u32 %v145, 7
    %v147 = vsub.s32 %v144, %v146
    %v148 = vrot.slane %v135, %v147
    %vm149 = vcmask 130112
    %v150 = vsel %vm149, %v148, %v143
    %vm152 = vcmask 122880
    %153 = vst.msk [vmem:[#allocation7] sm:$0x1] %vm152, %v150
    // Predicated region
    $region18: #{tpu_custom_call.1} parent=1 // pred_check
      _
    $region19: #{tpu_custom_call.1} parent=1 // pred_check_branch
      %155 = sbr.rel (0) target = $region21
    $region20: #{tpu_custom_call.1} parent=1 // pred_region
      %s157 = ssub.s32 16, 16
      %158 = vsyncadd [#allocation4], %s157
      %s160 = sshll.u32 [#allocation7], 4
      %s161 = int_to_ptr.vmem [resolvable:$true] %s160
      %163 = dma.vmem_to_hbm [thread:$0]  %s161, 16, %s2, [#allocation4]
    $region21: #{tpu_custom_call.1} parent=1 // pred_fallthru
      _
    // Predicated region
    $region22: #{tpu_custom_call.1} parent=1 // pred_check
      _
    $region23: #{tpu_custom_call.1} parent=1 // pred_check_branch
      %165 = sbr.rel (0) target = $region25
    $region24: #{tpu_custom_call.1} parent=1 // pred_region
      %166 = dma.done [#allocation4], 16
    $region25: #{tpu_custom_call.1} parent=1 // pred_fallthru
      _
    %167 = vsyncpa [#allocation3], 1
    %168 = vsyncpa [#allocation6], 1
    %169 = vsyncpa [#allocation4], 1

</llo_original>
